<compile_context>
chip_gen: v6e
topology: v6e:2x2x1
jax: 0.10.0
libtpu: 0.0.40
codegen_flags: <defaults>
</compile_context>

<pallas_src>
import jax
import jax.numpy as jnp
from jax.experimental import pallas as pl
from jax.experimental.pallas import tpu as pltpu


def cheb_conv_kernel(adj_ref, sat_ref, xw_ref, theta_blk_ref, out_ref):
    # adj_ref:       (N, N)              -- _1stChebNet (grid-invariant)
    # sat_ref:       (N, N)              -- spatial attention for this batch
    # xw_ref:        (N, T*C_in)         -- xw[m, t*C_in + c] = x[t, m, c]
    # theta_blk_ref: (T*C_in, T*C_out)   -- kron(I_T, Theta), grid-invariant
    # out_ref:       (N, T*C_out)        -- lane-dense output slab (256 lanes)

    # Attention-scaled adjacency: once per batch element (VPU elementwise).
    tka = adj_ref[...] * sat_ref[...]                              # (N, N)

    # Adjacency contraction for ALL T time steps in a single 2D MXU op.
    y = jnp.dot(tka, xw_ref[...],
                preferred_element_type=jnp.float32)                # (N, T*C_in)

    # Theta contraction for ALL T time steps in a single 2D MXU op
    # (block-diagonal Theta keeps each time step's channels independent).
    o = jnp.dot(y, theta_blk_ref[...],
                preferred_element_type=jnp.float32)                # (N, T*C_out)

    # ReLU on the final (single Chebyshev term) output, matching PyTorch.
    out_ref[...] = jnp.maximum(o, 0.0).astype(out_ref.dtype)


@jax.jit
def cheb_conv_with_sat(x, spatial_attention, cheb_adj, theta):
    """x: (B, T, N, C_in) -> output (B, N, C_out, T), matching PyTorch."""
    B, T, N, C_in = x.shape
    C_out = theta.shape[1]

    # Wrapper-side layout plumbing (fused/cheap under jit, outside the kernel):
    #   xw[b, m, t*C_in + c] = x[b, t, m, c]
    xw = jnp.transpose(x, (0, 2, 1, 3)).reshape(B, N, T * C_in)
    #   theta_blk[t*C_in + c, t'*C_out + co] = (t == t') * theta[c, co]
    theta_blk = jnp.kron(jnp.eye(T, dtype=theta.dtype), theta)      # (T*C_in, T*C_out)

    out_flat = pl.pallas_call(
        cheb_conv_kernel,
        out_shape=jax.ShapeDtypeStruct((B, N, T * C_out), x.dtype),
        grid=(B,),
        in_specs=[
            pl.BlockSpec((N, N), lambda b: (0, 0)),                       # adjacency (full)
            pl.BlockSpec((None, N, N), lambda b: (b, 0, 0)),              # spatial attn (squeezed B)
            pl.BlockSpec((None, N, T * C_in), lambda b: (b, 0, 0)),       # xw, all T per batch
            pl.BlockSpec((T * C_in, T * C_out), lambda b: (0, 0)),        # block-diag Theta (full)
        ],
        out_specs=pl.BlockSpec((None, N, T * C_out), lambda b: (b, 0, 0)),
        compiler_params=pltpu.CompilerParams(
            # B >= 2 parallel iterations -> both v7x TensorCores engaged; on
            # v5e/v6e this is just a short serial loop.
            dimension_semantics=("parallel",),
            # Few-tens-of-KiB blocks; explicit, conservative budget valid on
            # every generation (v7x physical VMEM = 64 MiB).
            vmem_limit_bytes=32 * 1024 * 1024,
        ),
    )(cheb_adj, spatial_attention, xw, theta_blk)

    # out_flat[b, n, t*C_out + co] -> (B, N, C_out, T) PyTorch layout.
    return jnp.transpose(out_flat.reshape(B, N, T, C_out), (0, 1, 3, 2))


def cheb_conv_reference(x, spatial_attention, cheb_adj, theta):
    """Pure-JAX reference mirroring the provided PyTorch forward exactly."""
    # x: (B, T, N, C_in) -> permute(0,2,3,1): (B, N, C_in, T)
    xp = jnp.transpose(x, (0, 2, 3, 1))
    tka = cheb_adj[None, :, :] * spatial_attention                   # (B, N, N)
    outs = []
    T = xp.shape[-1]
    for t in range(T):
        gs = xp[:, :, :, t]                                          # (B, N, C_in)
        rhs = jnp.einsum('bnm,bmc->bnc', tka, gs)
        out = jnp.einsum('bnc,co->bno', rhs, theta)
        outs.append(out[..., None])
    return jax.nn.relu(jnp.concatenate(outs, axis=-1))               # (B, N, C_out, T)


if __name__ == "__main__":
    B, T, N, C_in, C_out = 2, 8, 16, 4, 32

    key = jax.random.PRNGKey(0)
    k_x, k_sat, k_adj, k_theta = jax.random.split(key, 4)

    x = jax.random.normal(k_x, (B, T, N, C_in), dtype=jnp.float32)
    spatial_attention = jax.random.uniform(k_sat, (B, N, N), dtype=jnp.float32)
    cheb_adj = jax.random.normal(k_adj, (N, N), dtype=jnp.float32)
    # Deterministic init of the Theta parameter (in_channels, out_channels).
    theta = jax.random.normal(k_theta, (C_in, C_out), dtype=jnp.float32) * 0.1

    out = cheb_conv_with_sat(x, spatial_attention, cheb_adj, theta)
    out = jax.block_until_ready(out)

    ref = cheb_conv_reference(x, spatial_attention, cheb_adj, theta)
    assert out.shape == (B, N, C_out, T), out.shape
    assert jnp.allclose(out, ref, atol=1e-4, rtol=1e-4), "mismatch vs reference"

    print("KERNEL_OK")
</pallas_src>

<mosaic_0001>
module attributes {stable_mosaic.version = 11 : i64} {
  func.func @cheb_conv_kernel(%arg0: i32, %arg1: memref<16x16xf32, #tpu.memory_space<vmem>>, %arg2: memref<1x16x16xf32, #tpu.memory_space<vmem>>, %arg3: memref<1x16x32xf32, #tpu.memory_space<vmem>>, %arg4: memref<32x256xf32, #tpu.memory_space<vmem>>, %arg5: memref<1x16x256xf32, #tpu.memory_space<vmem>>) attributes {dimension_semantics = [#tpu.dimension_semantics<parallel>], iteration_bounds = array<i64: 2>, scalar_prefetch = 0 : i64, scratch_operands = 0 : i64, tpu.core_type = #tpu.core_type<tc>, window_params = [{pipeline_mode = #tpu.pipeline_mode<synchronous>, transform_indices = @transform_0, window_bounds = array<i64: 16, 16>}, {transform_indices = @transform_1, window_bounds = array<i64: 1, 16, 16>}, {transform_indices = @transform_2, window_bounds = array<i64: 1, 16, 32>}, {pipeline_mode = #tpu.pipeline_mode<synchronous>, transform_indices = @transform_3, window_bounds = array<i64: 32, 256>}, {transform_indices = @transform_4, window_bounds = array<i64: 1, 16, 256>}]} {
    %c0 = arith.constant 0 : index
    %c0_0 = arith.constant 0 : index
    %0 = vector.load %arg1[%c0, %c0_0] : memref<16x16xf32, #tpu.memory_space<vmem>>, vector<16x16xf32>
    %c0_1 = arith.constant 0 : index
    %c0_2 = arith.constant 0 : index
    %c0_3 = arith.constant 0 : index
    %1 = vector.load %arg2[%c0_1, %c0_2, %c0_3] : memref<1x16x16xf32, #tpu.memory_space<vmem>>, vector<1x16x16xf32>
    %2 = vector.shape_cast %1 : vector<1x16x16xf32> to vector<16x16xf32>
    %3 = arith.mulf %0, %2 : vector<16x16xf32>
    %c0_4 = arith.constant 0 : index
    %c0_5 = arith.constant 0 : index
    %c0_6 = arith.constant 0 : index
    %4 = vector.load %arg3[%c0_4, %c0_5, %c0_6] : memref<1x16x32xf32, #tpu.memory_space<vmem>>, vector<1x16x32xf32>
    %5 = vector.shape_cast %4 : vector<1x16x32xf32> to vector<16x32xf32>
    %cst = arith.constant dense<0.000000e+00> : vector<16x32xf32>
    %6 = tpu.matmul %3, %5, %cst {dimension_numbers = #tpu.dot_dimension_numbers<[1], [0], [0], [1], [0, 0, 1, 1], [], []>} : vector<16x16xf32>, vector<16x32xf32>, vector<16x32xf32> -> vector<16x32xf32>
    %c0_7 = arith.constant 0 : index
    %c0_8 = arith.constant 0 : index
    %7 = vector.load %arg4[%c0_7, %c0_8] : memref<32x256xf32, #tpu.memory_space<vmem>>, vector<32x256xf32>
    %cst_9 = arith.constant dense<0.000000e+00> : vector<16x256xf32>
    %8 = tpu.matmul %6, %7, %cst_9 {dimension_numbers = #tpu.dot_dimension_numbers<[1], [0], [0], [1], [0, 0, 1, 1], [], []>} : vector<16x32xf32>, vector<32x256xf32>, vector<16x256xf32> -> vector<16x256xf32>
    %cst_10 = arith.constant 0.000000e+00 : f32
    %9 = vector.broadcast %cst_10 : f32 to vector<16x256xf32>
    %10 = arith.maximumf %8, %9 : vector<16x256xf32>
    %c0_11 = arith.constant 0 : index
    %c0_12 = arith.constant 0 : index
    %c0_13 = arith.constant 0 : index
    %11 = vector.load %arg5[%c0_11, %c0_12, %c0_13] : memref<1x16x256xf32, #tpu.memory_space<vmem>>, vector<1x16x256xf32>
    %12 = vector.shape_cast %11 : vector<1x16x256xf32> to vector<16x256xf32>
    %13 = vector.shape_cast %10 : vector<16x256xf32> to vector<1x16x256xf32>
    tpu.vector_store %arg5[%c0_11, %c0_12, %c0_13], %13 {strides = array<i32>} : memref<1x16x256xf32, #tpu.memory_space<vmem>>, vector<1x16x256xf32>,
    return
  }
  func.func @transform_0(%arg0: i32) -> (i32, i32) {
    %c0_i32 = arith.constant 0 : i32
    %c0_i32_0 = arith.constant 0 : i32
    %c0_i32_1 = arith.constant 0 : i32
    return %c0_i32, %c0_i32_0 : i32, i32
  }
  func.func @transform_1(%arg0: i32) -> (i32, i32, i32) {
    %c0_i32 = arith.constant 0 : i32
    %c0_i32_0 = arith.constant 0 : i32
    %c0_i32_1 = arith.constant 0 : i32
    return %arg0, %c0_i32, %c0_i32_0 : i32, i32, i32
  }
  func.func @transform_2(%arg0: i32) -> (i32, i32, i32) {
    %c0_i32 = arith.constant 0 : i32
    %c0_i32_0 = arith.constant 0 : i32
    %c0_i32_1 = arith.constant 0 : i32
    return %arg0, %c0_i32, %c0_i32_0 : i32, i32, i32
  }
  func.func @transform_3(%arg0: i32) -> (i32, i32) {
    %c0_i32 = arith.constant 0 : i32
    %c0_i32_0 = arith.constant 0 : i32
    %c0_i32_1 = arith.constant 0 : i32
    return %c0_i32, %c0_i32_0 : i32, i32
  }
  func.func @transform_4(%arg0: i32) -> (i32, i32, i32) {
    %c0_i32 = arith.constant 0 : i32
    %c0_i32_0 = arith.constant 0 : i32
    %c0_i32_1 = arith.constant 0 : i32
    return %arg0, %c0_i32, %c0_i32_0 : i32, i32, i32
  }
}

</mosaic_0001>

<llo_original>
// kernel: cheb_conv_with_sat.1
$region0: #{cheb_conv_with_sat.1}
  #allocation0 [shape = 'u32[]', space=smem, size = 0x4, offset = 0x4, fixed_abs, tag = 'smem constant byte address 0x4 - core index']
  #allocation1 [shape = 'u32[144,128]{1,0:T(1,128)}', space=vmem, size = 0x12000, scoped, tag = 'internal scratch']
  %s0 = inlined_call_operand.vmem [shape: f32[16,16], index: 0, kind: input, shape index: {}]
  %s1 = inlined_call_operand.vmem [shape: f32[2,16,16], index: 1, kind: input, shape index: {}]
  %s2 = inlined_call_operand.vmem [shape: f32[2,16,32], index: 2, kind: input, shape index: {}]
  %s3 = inlined_call_operand.vmem [shape: f32[32,256], index: 3, kind: input, shape index: {}]
  %s4 = inlined_call_operand.vmem [shape: f32[2,16,256], index: 4, kind: output, shape index: {}]
  %s5 = sld [smem:[#allocation0]]
  $region49: #{cheb_conv_with_sat.1} parent=0
    _
  %s7 = ssub.s32 1, %s5
  %s8 = scalar_select 0, %s7, %s5
  loop: start=0, step=1, limit=4
  $region2: #{cheb_conv_with_sat.1} parent=0 // loop_pre_header
    _
  $region3: #{cheb_conv_with_sat.1} parent=0 // loop_header
    %s10 = sphi 0, %s14
    %p11 = scmp.ge.s32.totalorder %s10, 4
    %s18 = sphi 0, %s18
    %s20 = sphi 0, %s18
    %s21 = sphi 0, %s20
    %s35 = sphi 0, %s21
    %s41 = sphi 0, %s43
    %s44 = sphi 0, %s41
    %s45 = sphi 0, %s44
    %s61 = sphi 0, %s45
    %s67 = sphi 0, %s69
    %s70 = sphi 0, %s67
    %s71 = sphi 0, %s70
    %s87 = sphi 0, %s71
    %s91 = sphi 0, %s91
    %s93 = sphi 0, %s91
    %s94 = sphi 0, %s93
    %s108 = sphi 0, %s94
    %s114 = sphi 0, %s116
    %s117 = sphi 0, %s114
    %s118 = sphi 0, %s117
    %s134 = sphi 0, %s118
  $region4: #{cheb_conv_with_sat.1} parent=0 // loop_header_branch
    %13 = sbr.rel (%p11) target = $region8
  $region5: #{cheb_conv_with_sat.1} parent=0 // loop_body
    %s15 = ssub.s32 %s10, 1
    %s16 = ssub.s32 %s10, 2
    %s17 = sadd.s32 %s10, 1
    %s19 = sadd.s32 %s18, 1
    %p22 = scmp.eq.s32.totalorder %s10, 1
    %p23 = scmp.ne.s32.totalorder %s18, %s20
    %p24 = scmp.eq.s32.totalorder %s10, 0
    %p25 = por %p23, %p24
    %p26 = scmp.ne.s32.totalorder %s18, %s20
    %p27 = scmp.eq.s32.totalorder %s15, 1
    %p28 = por %p26, %p27
    %p29 = scmp.ne.s32.totalorder %s20, %s21
    %p30 = scmp.eq.s32.totalorder %s15, 0
    %p31 = por %p29, %p30
    %p32 = scmp.ne.s32.totalorder %s20, %s21
    %p33 = scmp.eq.s32.totalorder %s16, 1
    %p34 = por %p32, %p33
    %p36 = scmp.ne.s32.totalorder %s21, %s35
    %p37 = scmp.eq.s32.totalorder %s16, 0
    %p38 = por %p36, %p37
    %s39 = ssub.s32 %s10, %s17
    %p40 = scmp.eq.s32.totalorder %s39, 0
    %s42 = sadd.s32 %s41, 1
    %s43 = scalar_select %p40, %s41, %s42
    %p46 = pneg %p40
    %p47 = scmp.eq.s32.totalorder %s10, 1
    %p48 = por %p46, %p47
    %p49 = scmp.ne.s32.totalorder %s41, %s44
    %p50 = scmp.eq.s32.totalorder %s10, 0
    %p51 = por %p49, %p50
    %p52 = scmp.ne.s32.totalorder %s41, %s44
    %p53 = scmp.eq.s32.totalorder %s15, 1
    %p54 = por %p52, %p53
    %p55 = scmp.ne.s32.totalorder %s44, %s45
    %p56 = scmp.eq.s32.totalorder %s15, 0
    %p57 = por %p55, %p56
    %p58 = scmp.ne.s32.totalorder %s44, %s45
    %p59 = scmp.eq.s32.totalorder %s16, 1
    %p60 = por %p58, %p59
    %p62 = scmp.ne.s32.totalorder %s45, %s61
    %p63 = scmp.eq.s32.totalorder %s16, 0
    %p64 = por %p62, %p63
    %s65 = ssub.s32 %s10, %s17
    %p66 = scmp.eq.s32.totalorder %s65, 0
    %s68 = sadd.s32 %s67, 1
    %s69 = scalar_select %p66, %s67, %s68
    %p72 = pneg %p66
    %p73 = scmp.eq.s32.totalorder %s10, 1
    %p74 = por %p72, %p73
    %p75 = scmp.ne.s32.totalorder %s67, %s70
    %p76 = scmp.eq.s32.totalorder %s10, 0
    %p77 = por %p75, %p76
    %p78 = scmp.ne.s32.totalorder %s67, %s70
    %p79 = scmp.eq.s32.totalorder %s15, 1
    %p80 = por %p78, %p79
    %p81 = scmp.ne.s32.totalorder %s70, %s71
    %p82 = scmp.eq.s32.totalorder %s15, 0
    %p83 = por %p81, %p82
    %p84 = scmp.ne.s32.totalorder %s70, %s71
    %p85 = scmp.eq.s32.totalorder %s16, 1
    %p86 = por %p84, %p85
    %p88 = scmp.ne.s32.totalorder %s71, %s87
    %p89 = scmp.eq.s32.totalorder %s16, 0
    %p90 = por %p88, %p89
    %s92 = sadd.s32 %s91, 1
    %p95 = scmp.eq.s32.totalorder %s10, 1
    %p96 = scmp.ne.s32.totalorder %s91, %s93
    %p97 = scmp.eq.s32.totalorder %s10, 0
    %p98 = por %p96, %p97
    %p99 = scmp.ne.s32.totalorder %s91, %s93
    %p100 = scmp.eq.s32.totalorder %s15, 1
    %p101 = por %p99, %p100
    %p102 = scmp.ne.s32.totalorder %s93, %s94
    %p103 = scmp.eq.s32.totalorder %s15, 0
    %p104 = por %p102, %p103
    %p105 = scmp.ne.s32.totalorder %s93, %s94
    %p106 = scmp.eq.s32.totalorder %s16, 1
    %p107 = por %p105, %p106
    %p109 = scmp.ne.s32.totalorder %s94, %s108
    %p110 = scmp.eq.s32.totalorder %s16, 0
    %p111 = por %p109, %p110
    %s112 = ssub.s32 %s10, %s17
    %p113 = scmp.eq.s32.totalorder %s112, 0
    %s115 = sadd.s32 %s114, 1
    %s116 = scalar_select %p113, %s114, %s115
    %p119 = pneg %p113
    %p120 = scmp.eq.s32.totalorder %s10, 1
    %p121 = por %p119, %p120
    %p122 = scmp.ne.s32.totalorder %s114, %s117
    %p123 = scmp.eq.s32.totalorder %s10, 0
    %p124 = por %p122, %p123
    %p125 = scmp.ne.s32.totalorder %s114, %s117
    %p126 = scmp.eq.s32.totalorder %s15, 1
    %p127 = por %p125, %p126
    %p128 = scmp.ne.s32.totalorder %s117, %s118
    %p129 = scmp.eq.s32.totalorder %s15, 0
    %p130 = por %p128, %p129
    %p131 = scmp.ne.s32.totalorder %s117, %s118
    %p132 = scmp.eq.s32.totalorder %s16, 1
    %p133 = por %p131, %p132
    %p135 = scmp.ne.s32.totalorder %s118, %s134
    %p136 = scmp.eq.s32.totalorder %s16, 0
    %p137 = por %p135, %p136
    %p138 = scmp.le.s32.totalorder 1, %s10
    %p139 = scmp.lt.s32.totalorder %s10, 3
    %p140 = pnand %p138, %p139
    %p141 = pneg %p140
    // Predicated region
    $region9: #{cheb_conv_with_sat.1} parent=5 // pred_check
      _
    $region10: #{cheb_conv_with_sat.1} parent=5 // pred_check_branch
      %143 = sbr.rel (%p140) target = $region12
    $region11: #{cheb_conv_with_sat.1} parent=5 // pred_region
      %s144 = ssub.s32 %s10, 1
      // Predicated region
      $region13: #{cheb_conv_with_sat.1} parent=11 // pred_check
        %p145 = pneg %p31
      $region14: #{cheb_conv_with_sat.1} parent=11 // pred_check_branch
        %147 = sbr.rel (%p145) target = $region16
      $region15: #{cheb_conv_with_sat.1} parent=11 // pred_region
        _
      $region16: #{cheb_conv_with_sat.1} parent=11 // pred_fallthru
        _
      // Predicated region
      $region17: #{cheb_conv_with_sat.1} parent=11 // pred_check
        %p148 = pneg %p104
      $region18: #{cheb_conv_with_sat.1} parent=11 // pred_check_branch
        %150 = sbr.rel (%p148) target = $region20
      $region19: #{cheb_conv_with_sat.1} parent=11 // pred_region
        _
      $region20: #{cheb_conv_with_sat.1} parent=11 // pred_fallthru
        _
    $region12: #{cheb_conv_with_sat.1} parent=5 // pred_fallthru
      _
    %p151 = scmp.lt.s32.totalorder %s10, 2
    // Predicated region
    $region21: #{cheb_conv_with_sat.1} parent=5 // pred_check
      %p152 = pneg %p151
    $region22: #{cheb_conv_with_sat.1} parent=5 // pred_check_branch
      %154 = sbr.rel (%p152) target = $region24
    $region23: #{cheb_conv_with_sat.1} parent=5 // pred_region
      // Predicated region
      $region25: #{cheb_conv_with_sat.1} parent=23 // pred_check
        %p155 = pneg %p51
      $region26: #{cheb_conv_with_sat.1} parent=23 // pred_check_branch
        %157 = sbr.rel (%p155) target = $region28
      $region27: #{cheb_conv_with_sat.1} parent=23 // pred_region
        %p158 = scmp.lt.s32.totalorder %s10, 1
        %s159 = scalar_select %p158, %s10, 1
        %s160 = smul.addr %s159, 2
        %s161 = smul.addr %s160, 8
        %s162 = scalar_lea.vmem %s1, %s161
      $region28: #{cheb_conv_with_sat.1} parent=23 // pred_fallthru
        _
      // Predicated region
      $region29: #{cheb_conv_with_sat.1} parent=23 // pred_check
        %p163 = pneg %p77
      $region30: #{cheb_conv_with_sat.1} parent=23 // pred_check_branch
        %165 = sbr.rel (%p163) target = $region32
      $region31: #{cheb_conv_with_sat.1} parent=23 // pred_region
        %p166 = scmp.lt.s32.totalorder %s10, 1
        %s167 = scalar_select %p166, %s10, 1
        %s168 = smul.addr %s167, 2
        %s169 = smul.addr %s168, 8
        %s170 = scalar_lea.vmem %s2, %s169
      $region32: #{cheb_conv_with_sat.1} parent=23 // pred_fallthru
        _
    $region24: #{cheb_conv_with_sat.1} parent=5 // pred_fallthru
      _
    %p171 = scmp.le.s32.totalorder 1, %s10
    %p172 = scmp.lt.s32.totalorder %s10, 3
    %p173 = pnand %p171, %p172
    %p174 = pneg %p173
    // Predicated region
    $region33: #{cheb_conv_with_sat.1} parent=5 // pred_check
      _
    $region34: #{cheb_conv_with_sat.1} parent=5 // pred_check_branch
      %176 = sbr.rel (%p173) target = $region36
    $region35: #{cheb_conv_with_sat.1} parent=5 // pred_region
      %s177 = ssub.s32 %s10, 1
      %p178 = pneg %p31
      %p179 = pneg %p28
      %p180 = scmp.lt.s32.totalorder %s15, 1
      %s181 = scalar_select %p180, %s15, 1
      %s182 = smul.addr %s181, 2
      %s183 = smul.addr %s182, 8
      %s184 = scalar_lea.vmem %s1, %s183
      %p185 = pneg %p57
      %p186 = pneg %p54
      %p187 = scmp.lt.s32.totalorder %s15, 1
      %s188 = scalar_select %p187, %s15, 1
      %s189 = smul.addr %s188, 2
      %s190 = smul.addr %s189, 8
      %s191 = scalar_lea.vmem %s2, %s190
      %p192 = pneg %p83
      %p193 = pneg %p80
      %p194 = pneg %p104
      %p195 = pneg %p101
      %p196 = pneg %p130
      %p197 = pneg %p127
      %p198 = scmp.lt.s32.totalorder %s15, 1
      %s199 = scalar_select %p198, %s15, 1
      %s200 = smul.addr %s199, 4
      %s201 = smul.addr %s200, 8
      %s202 = scalar_lea.vmem %s4, %s201
      %p203 = scmp.lt.s32.totalorder %s15, 1
      %s204 = scalar_select %p203, %s15, 1
      %s205 = smul.addr %s204, 2
      %s206 = smul.addr %s205, 8
      %s207 = scalar_lea.vmem %s1, %s206
      %p208 = scmp.lt.s32.totalorder %s15, 1
      %s209 = scalar_select %p208, %s15, 1
      %s210 = smul.addr %s209, 2
      %s211 = smul.addr %s210, 8
      %s212 = scalar_lea.vmem %s2, %s211
      %p213 = scmp.lt.s32.totalorder %s15, 1
      %s214 = scalar_select %p213, %s15, 1
      %s215 = smul.addr %s214, 4
      %s216 = smul.addr %s215, 8
      %s217 = scalar_lea.vmem %s4, %s216
      %v218 = vld [vmem:[%s0] sm:$0xff]
      %v219 = vld [vmem:[%s0 + $0x8] sm:$0xff]
      %v220 = vld [vmem:[%s207] sm:$0xff]
      %v221 = vld [vmem:[%s207 + $0x8] sm:$0xff]
      %v222 = vmul.f32 %v218, %v220
      %v223 = vmul.f32 %v219, %v221
      %v224 = vld [vmem:[%s212] sm:$0xff]
      %v225 = vld [vmem:[%s212 + $0x8] sm:$0xff]
      %vm226 = vcmask 130048
      %v228 = vsel %vm226, %v222, 0
      %v231 = vsel %vm226, %v223, 0
      %233 = vmatprep.subr.mxu0 0.0
      %234 = vmatpush1.msra.mxu0 0.0
      %235 = vmatprep.subr.mxu0 0.0
      %236 = vmatpush1.msra.mxu0 0.0
      %237 = vmatprep.subr.mxu0 0.0
      %238 = vmatpush1.msra.mxu0 0.0
      %239 = vmatprep.subr.mxu0 0.0
      %240 = vmatpush1.msra.mxu0 0.0
      %241 = vmatprep.subr.mxu0 0.0
      %242 = vmatpush1.msra.mxu0 0.0
      %243 = vmatprep.subr.mxu0 0.0
      %244 = vmatpush1.msra.mxu0 0.0
      %245 = vmatprep.subr.mxu0 0.0
      %246 = vmatpush1.msra.mxu0 0.0
      %247 = vmatprep.subr.mxu0 0.0
      %248 = vmatpush1.msra.mxu0 0.0
      %249 = vmatprep.subr.mxu0 0.0
      %250 = vmatpush1.msra.mxu0 0.0
      %251 = vmatprep.subr.mxu0 0.0
      %252 = vmatpush1.msra.mxu0 0.0
      %253 = vmatprep.subr.mxu0 0.0
      %254 = vmatpush1.msra.mxu0 0.0
      %255 = vmatprep.subr.mxu0 0.0
      %256 = vmatpush1.msra.mxu0 0.0
      %257 = vmatprep.subr.mxu0 0.0
      %258 = vmatpush1.msra.mxu0 0.0
      %259 = vmatprep.subr.mxu0 0.0
      %260 = vmatpush1.msra.mxu0 0.0
      %261 = vmatprep.subr.mxu0 0.0
      %262 = vmatpush1.msra.mxu0 %v225
      %263 = vmatprep.subr.mxu0 0.0
      %264 = vmatpush1.msra.mxu0 %v224
      %265 = vmatprep.subr.mxu0 0.0
      %266 = vmatpush2.msra.mxu0 0.0
      %267 = vmatprep.subr.mxu0 0.0
      %268 = vmatpush2.msra.mxu0 0.0
      %269 = vmatprep.subr.mxu0 0.0
      %270 = vmatpush2.msra.mxu0 0.0
      %271 = vmatprep.subr.mxu0 0.0
      %272 = vmatpush2.msra.mxu0 0.0
      %273 = vmatprep.subr.mxu0 0.0
      %274 = vmatpush2.msra.mxu0 0.0
      %275 = vmatprep.subr.mxu0 0.0
      %276 = vmatpush2.msra.mxu0 0.0
      %277 = vmatprep.subr.mxu0 0.0
      %278 = vmatpush2.msra.mxu0 0.0
      %279 = vmatprep.subr.mxu0 0.0
      %280 = vmatpush2.msra.mxu0 0.0
      %281 = vmatprep.subr.mxu0 0.0
      %282 = vmatpush2.msra.mxu0 0.0
      %283 = vmatprep.subr.mxu0 0.0
      %284 = vmatpush2.msra.mxu0 0.0
      %285 = vmatprep.subr.mxu0 0.0
      %286 = vmatpush2.msra.mxu0 0.0
      %287 = vmatprep.subr.mxu0 0.0
      %288 = vmatpush2.msra.mxu0 0.0
      %289 = vmatprep.subr.mxu0 0.0
      %290 = vmatpush2.msra.mxu0 0.0
      %291 = vmatprep.subr.mxu0 0.0
      %292 = vmatpush2.msra.mxu0 0.0
      %293 = vmatprep.subr.mxu0 0.0
      %294 = vmatpush2.msra.mxu0 0.0
      %295 = vmatprep.subr.mxu0 0.0
      %296 = vmatpush2.msra.mxu0 0.0
      %297 = vmatprep.mubr.f32.mxu0 0.0
      %298 = vmatmul.mubr.f32.gmra.mxu0 %v228
      %v299 = vpop.f32.mrf.mxu0
      %v300 = vadd.f32 0.0, %v299
      %v301 = vpop.f32.mrf.mxu0
      %302 = vmatprep.mubr.f32.mxu0 0.0
      %303 = vmatmul.mubr.f32.gmra.mxu0 %v231
      %v304 = vpop.f32.mrf.mxu0
      %v305 = vadd.f32 0.0, %v304
      %v306 = vpop.f32.mrf.mxu0
      %307 = vdwg.mxu0
      %v308 = vld [vmem:[%s3] sm:$0xff]
      %v309 = vld [vmem:[%s3 + $0x8] sm:$0xff]
      %v310 = vld [vmem:[%s3 + $0x10] sm:$0xff]
      %v311 = vld [vmem:[%s3 + $0x18] sm:$0xff]
      %v312 = vld [vmem:[%s3 + $0x20] sm:$0xff]
      %v313 = vld [vmem:[%s3 + $0x28] sm:$0xff]
      %v314 = vld [vmem:[%s3 + $0x30] sm:$0xff]
      %v315 = vld [vmem:[%s3 + $0x38] sm:$0xff]
      %vm316 = vcmask 261120
      %v318 = vsel %vm316, %v300, 0
      %v321 = vsel %vm316, %v305, 0
      %323 = vmatprep.subr.mxu0 0.0
      %324 = vmatpush1.msra.mxu0 0.0
      %325 = vmatprep.subr.mxu0 0.0
      %326 = vmatpush1.msra.mxu0 0.0
      %327 = vmatprep.subr.mxu0 0.0
      %328 = vmatpush1.msra.mxu0 0.0
      %329 = vmatprep.subr.mxu0 0.0
      %330 = vmatpush1.msra.mxu0 0.0
      %331 = vmatprep.subr.mxu0 0.0
      %332 = vmatpush1.msra.mxu0 0.0
      %333 = vmatprep.subr.mxu0 0.0
      %334 = vmatpush1.msra.mxu0 0.0
      %335 = vmatprep.subr.mxu0 0.0
      %336 = vmatpush1.msra.mxu0 0.0
      %337 = vmatprep.subr.mxu0 0.0
      %338 = vmatpush1.msra.mxu0 0.0
      %339 = vmatprep.subr.mxu0 0.0
      %340 = vmatpush1.msra.mxu0 0.0
      %341 = vmatprep.subr.mxu0 0.0
      %342 = vmatpush1.msra.mxu0 0.0
      %343 = vmatprep.subr.mxu0 0.0
      %344 = vmatpush1.msra.mxu0 0.0
      %345 = vmatprep.subr.mxu0 0.0
      %346 = vmatpush1.msra.mxu0 0.0
      %347 = vmatprep.subr.mxu0 %v315
      %348 = vmatpush1.msra.mxu0 %v314
      %349 = vmatprep.subr.mxu0 %v313
      %350 = vmatpush1.msra.mxu0 %v312
      %351 = vmatprep.subr.mxu0 %v311
      %352 = vmatpush1.msra.mxu0 %v310
      %353 = vmatprep.subr.mxu0 %v309
      %354 = vmatpush1.msra.mxu0 %v308
      %355 = vmatprep.subr.mxu0 0.0
      %356 = vmatpush2.msra.mxu0 0.0
      %357 = vmatprep.subr.mxu0 0.0
      %358 = vmatpush2.msra.mxu0 0.0
      %359 = vmatprep.subr.mxu0 0.0
      %360 = vmatpush2.msra.mxu0 0.0
      %361 = vmatprep.subr.mxu0 0.0
      %362 = vmatpush2.msra.mxu0 0.0
      %363 = vmatprep.subr.mxu0 0.0
      %364 = vmatpush2.msra.mxu0 0.0
      %365 = vmatprep.subr.mxu0 0.0
      %366 = vmatpush2.msra.mxu0 0.0
      %367 = vmatprep.subr.mxu0 0.0
      %368 = vmatpush2.msra.mxu0 0.0
      %369 = vmatprep.subr.mxu0 0.0
      %370 = vmatpush2.msra.mxu0 0.0
      %371 = vmatprep.subr.mxu0 0.0
      %372 = vmatpush2.msra.mxu0 0.0
      %373 = vmatprep.subr.mxu0 0.0
      %374 = vmatpush2.msra.mxu0 0.0
      %375 = vmatprep.subr.mxu0 0.0
      %376 = vmatpush2.msra.mxu0 0.0
      %377 = vmatprep.subr.mxu0 0.0
      %378 = vmatpush2.msra.mxu0 0.0
      %379 = vmatprep.subr.mxu0 0.0
      %380 = vmatpush2.msra.mxu0 0.0
      %381 = vmatprep.subr.mxu0 0.0
      %382 = vmatpush2.msra.mxu0 0.0
      %383 = vmatprep.subr.mxu0 0.0
      %384 = vmatpush2.msra.mxu0 0.0
      %385 = vmatprep.subr.mxu0 0.0
      %386 = vmatpush2.msra.mxu0 0.0
      %387 = vmatprep.mubr.f32.mxu0 0.0
      %388 = vmatmul.mubr.f32.gmra.mxu0 %v318
      %v389 = vpop.f32.mrf.mxu0
      %v390 = vadd.f32 0.0, %v389
      %v391 = vpop.f32.mrf.mxu0
      %v392 = vadd.f32 0.0, %v391
      %393 = vmatprep.mubr.f32.mxu0 0.0
      %394 = vmatmul.mubr.f32.gmra.mxu0 %v321
      %v395 = vpop.f32.mrf.mxu0
      %v396 = vadd.f32 0.0, %v395
      %v397 = vpop.f32.mrf.mxu0
      %v398 = vadd.f32 0.0, %v397
      %399 = vdwg.mxu0
      %v400 = vmax.f32 %v390, 0.0
      %v401 = vmax.f32 %v392, 0.0
      %v402 = vmax.f32 %v396, 0.0
      %v403 = vmax.f32 %v398, 0.0
      %404 = vst [vmem:[%s217] sm:$0xff] %v400
      %405 = vst [vmem:[%s217 + $0x8] sm:$0xff] %v401
      %406 = vst [vmem:[%s217 + $0x10] sm:$0xff] %v402
      %407 = vst [vmem:[%s217 + $0x18] sm:$0xff] %v403
      %p408 = scmp.lt.s32.totalorder %s15, 1
      %s409 = scalar_select %p408, %s15, 1
      %s410 = smul.addr %s409, 4
      %s411 = smul.addr %s410, 8
      %s412 = scalar_lea.vmem %s4, %s411
      // Predicated region
      $region37: #{cheb_conv_with_sat.1} parent=35 // pred_check
        %p413 = pneg %p127
      $region38: #{cheb_conv_with_sat.1} parent=35 // pred_check_branch
        %415 = sbr.rel (%p413) target = $region40
      $region39: #{cheb_conv_with_sat.1} parent=35 // pred_region
        _
      $region40: #{cheb_conv_with_sat.1} parent=35 // pred_fallthru
        _
    $region36: #{cheb_conv_with_sat.1} parent=5 // pred_fallthru
      _
    %p416 = scmp.le.s32.totalorder 2, %s10
    // Predicated region
    $region41: #{cheb_conv_with_sat.1} parent=5 // pred_check
      %p417 = pneg %p416
    $region42: #{cheb_conv_with_sat.1} parent=5 // pred_check_branch
      %419 = sbr.rel (%p417) target = $region44
    $region43: #{cheb_conv_with_sat.1} parent=5 // pred_region
      %s420 = ssub.s32 %s10, 2
      // Predicated region
      $region45: #{cheb_conv_with_sat.1} parent=43 // pred_check
        %p421 = pneg %p133
      $region46: #{cheb_conv_with_sat.1} parent=43 // pred_check_branch
        %423 = sbr.rel (%p421) target = $region48
      $region47: #{cheb_conv_with_sat.1} parent=43 // pred_region
        %p424 = scmp.lt.s32.totalorder %s16, 1
        %s425 = scalar_select %p424, %s16, 1
        %s426 = smul.addr %s425, 4
        %s427 = smul.addr %s426, 8
        %s428 = scalar_lea.vmem %s4, %s427
      $region48: #{cheb_conv_with_sat.1} parent=43 // pred_fallthru
        _
    $region44: #{cheb_conv_with_sat.1} parent=5 // pred_fallthru
      _
  $region6: #{cheb_conv_with_sat.1} parent=0 // loop_footer
    %s14 = sadd.s32 1, %s10
  $region7: #{cheb_conv_with_sat.1} parent=0 // loop_footer_branch
    %9 = sbr.rel target = $region3
  $region8: #{cheb_conv_with_sat.1} parent=0 // loop_exit
    _

</llo_original>
